<compile_context>
chip_gen: v7x
topology: tpu7x:2x2x1
jax: 0.10.0
libtpu: 0.0.40
codegen_flags: <defaults>
</compile_context>

<pallas_src>
import jax
import jax.numpy as jnp
from jax.experimental import pallas as pl
from jax.experimental.pallas import tpu as pltpu


def mlp_kernel(x_ref, w1_ref, b1_ref, w2_ref, b2_ref, o_ref):
    # x: (1, TB)   batch on lanes
    # w1,b1: (10, 1)  hidden-layer weight/bias (fan_in = 1)
    # w2: (10, 1)     output-layer weight (pre-transposed), b2: (1, 1)
    x = x_ref[...]                                    # (1, TB)  f32

    # hidden = relu(W1 * x + b1)  -> (10, TB)   (VPU broadcast multiply/add)
    h = jnp.maximum(w1_ref[...] * x + b1_ref[...], 0.0)

    # out = sigmoid(sum_h(W2 * h) + b2) -> (1, TB)  (VPU mul + small sublane reduce)
    z = jnp.sum(w2_ref[...] * h, axis=0, keepdims=True) + b2_ref[...]
    o_ref[...] = jax.nn.sigmoid(z).astype(o_ref.dtype)


def mlp_forward(x, w1, b1, w2, b2, *, batch_tile=None):
    """x: (B, 1) f32. w1,b1,w2: (10,1); b2: (1,1). Returns (B, 1) f32."""
    B = x.shape[0]
    if batch_tile is None:
        # Lane-dense tile: multiple of 128. Keep tiles modest so double-buffered
        # input+output stay far below v7x's 32 MiB default scoped VMEM.
        batch_tile = 1024 if B >= 1024 else 128
    n_tiles = pl.cdiv(B, batch_tile)
    Bp = n_tiles * batch_tile

    # Lane-dense, padded view of the batch: (1, Bp).
    x_lanes = jnp.pad(x[:, 0], (0, Bp - B)).reshape(1, Bp)

    out_lanes = pl.pallas_call(
        mlp_kernel,
        out_shape=jax.ShapeDtypeStruct((1, Bp), jnp.float32),
        grid=(n_tiles,),
        in_specs=[
            pl.BlockSpec((1, batch_tile), lambda i: (0, i)),  # x tile (pipelined)
            pl.BlockSpec(w1.shape, lambda i: (0, 0)),          # weights resident
            pl.BlockSpec(b1.shape, lambda i: (0, 0)),
            pl.BlockSpec(w2.shape, lambda i: (0, 0)),
            pl.BlockSpec(b2.shape, lambda i: (0, 0)),
        ],
        out_specs=pl.BlockSpec((1, batch_tile), lambda i: (0, i)),
        compiler_params=pltpu.CompilerParams(
            dimension_semantics=("parallel",),       # shard batch tiles across TCs (v7x)
            vmem_limit_bytes=32 * 1024 * 1024,       # safe on v5e/v6e/v7x; tiles are tiny
        ),
    )(x_lanes, w1, b1, w2, b2)

    return out_lanes[0, :B].reshape(B, 1)


def init_params(key):
    # Deterministic init mimicking nn.Linear's U(-1/sqrt(fan_in), 1/sqrt(fan_in)).
    # Stored in kernel-friendly column layout:
    #   w1, b1: (10, 1)  (hidden.weight / hidden.bias)
    #   w2:     (10, 1)  (output.weight transposed)
    #   b2:     (1, 1)   (output.bias)
    k1, k2, k3, k4 = jax.random.split(key, 4)
    bound1 = 1.0 / jnp.sqrt(1.0)    # hidden: fan_in = 1
    bound2 = 1.0 / jnp.sqrt(10.0)   # output: fan_in = 10
    w1 = jax.random.uniform(k1, (10, 1), jnp.float32, -bound1, bound1)
    b1 = jax.random.uniform(k2, (10, 1), jnp.float32, -bound1, bound1)
    w2 = jax.random.uniform(k3, (10, 1), jnp.float32, -bound2, bound2)
    b2 = jax.random.uniform(k4, (1, 1), jnp.float32, -bound2, bound2)
    return w1, b1, w2, b2


if __name__ == "__main__":
    key = jax.random.PRNGKey(0)
    kx, kp = jax.random.split(key)

    batch = 8
    x = jax.random.normal(kx, (batch, 1), jnp.float32)
    w1, b1, w2, b2 = init_params(kp)

    out = mlp_forward(x, w1, b1, w2, b2)
    out = jax.block_until_ready(out)

    # Reference check in plain JAX (same math as the PyTorch forward).
    h_ref = jnp.maximum(x @ w1.T + b1.T, 0.0)          # (B, 10)
    ref = jax.nn.sigmoid(h_ref @ w2 + b2)               # (B, 1)
    assert out.shape == (batch, 1)
    assert jnp.allclose(out, ref, atol=1e-6), "mismatch vs reference"

    print("KERNEL_OK")
</pallas_src>

<mosaic_0001>
module attributes {stable_mosaic.version = 11 : i64} {
  func.func @mlp_kernel(%arg0: i32, %arg1: memref<1x128xf32, #tpu.memory_space<vmem>>, %arg2: memref<10x1xf32, #tpu.memory_space<vmem>>, %arg3: memref<10x1xf32, #tpu.memory_space<vmem>>, %arg4: memref<10x1xf32, #tpu.memory_space<vmem>>, %arg5: memref<1x1xf32, #tpu.memory_space<vmem>>, %arg6: memref<1x128xf32, #tpu.memory_space<vmem>>) attributes {dimension_semantics = [#tpu.dimension_semantics<parallel>], iteration_bounds = array<i64: 1>, scalar_prefetch = 0 : i64, scratch_operands = 0 : i64, tpu.core_type = #tpu.core_type<tc>, window_params = [{transform_indices = @transform_0, window_bounds = array<i64: 1, 128>}, {pipeline_mode = #tpu.pipeline_mode<synchronous>, transform_indices = @transform_1, window_bounds = array<i64: 10, 1>}, {pipeline_mode = #tpu.pipeline_mode<synchronous>, transform_indices = @transform_2, window_bounds = array<i64: 10, 1>}, {pipeline_mode = #tpu.pipeline_mode<synchronous>, transform_indices = @transform_3, window_bounds = array<i64: 10, 1>}, {pipeline_mode = #tpu.pipeline_mode<synchronous>, transform_indices = @transform_4, window_bounds = array<i64: 1, 1>}, {transform_indices = @transform_5, window_bounds = array<i64: 1, 128>}]} {
    %c0 = arith.constant 0 : index
    %c0_0 = arith.constant 0 : index
    %0 = vector.load %arg1[%c0, %c0_0] : memref<1x128xf32, #tpu.memory_space<vmem>>, vector<1x128xf32>
    %c0_1 = arith.constant 0 : index
    %c0_2 = arith.constant 0 : index
    %1 = vector.load %arg2[%c0_1, %c0_2] : memref<10x1xf32, #tpu.memory_space<vmem>>, vector<10x1xf32>
    %2 = vector.broadcast %1 : vector<10x1xf32> to vector<10x128xf32>
    %3 = vector.broadcast %0 : vector<1x128xf32> to vector<10x128xf32>
    %4 = arith.mulf %2, %3 : vector<10x128xf32>
    %c0_3 = arith.constant 0 : index
    %c0_4 = arith.constant 0 : index
    %5 = vector.load %arg3[%c0_3, %c0_4] : memref<10x1xf32, #tpu.memory_space<vmem>>, vector<10x1xf32>
    %6 = vector.broadcast %5 : vector<10x1xf32> to vector<10x128xf32>
    %7 = arith.addf %4, %6 : vector<10x128xf32>
    %cst = arith.constant 0.000000e+00 : f32
    %8 = vector.broadcast %cst : f32 to vector<10x128xf32>
    %9 = arith.maximumf %7, %8 : vector<10x128xf32>
    %c0_5 = arith.constant 0 : index
    %c0_6 = arith.constant 0 : index
    %10 = vector.load %arg4[%c0_5, %c0_6] : memref<10x1xf32, #tpu.memory_space<vmem>>, vector<10x1xf32>
    %11 = vector.broadcast %10 : vector<10x1xf32> to vector<10x128xf32>
    %12 = arith.mulf %11, %9 : vector<10x128xf32>
    %cst_7 = arith.constant dense<0.000000e+00> : vector<128xf32>
    %13 = vector.multi_reduction <add>, %12, %cst_7 [0] : vector<10x128xf32> to vector<128xf32>
    %14 = vector.shape_cast %13 : vector<128xf32> to vector<1x128xf32>
    %c0_8 = arith.constant 0 : index
    %c0_9 = arith.constant 0 : index
    %15 = vector.load %arg5[%c0_8, %c0_9] : memref<1x1xf32, #tpu.memory_space<vmem>>, vector<1x1xf32>
    %16 = vector.broadcast %15 : vector<1x1xf32> to vector<1x128xf32>
    %17 = arith.addf %14, %16 : vector<1x128xf32>
    %18 = arith.negf %17 : vector<1x128xf32>
    %19 = math.exp %18 : vector<1x128xf32>
    %cst_10 = arith.constant 1.000000e+00 : f32
    %20 = vector.broadcast %cst_10 : f32 to vector<1x128xf32>
    %21 = arith.addf %20, %19 : vector<1x128xf32>
    %22 = arith.divf %20, %21 : vector<1x128xf32>
    %c0_11 = arith.constant 0 : index
    %c0_12 = arith.constant 0 : index
    %23 = vector.load %arg6[%c0_11, %c0_12] : memref<1x128xf32, #tpu.memory_space<vmem>>, vector<1x128xf32>
    tpu.vector_store %arg6[%c0_11, %c0_12], %22 {strides = array<i32>} : memref<1x128xf32, #tpu.memory_space<vmem>>, vector<1x128xf32>,
    return
  }
  func.func @transform_0(%arg0: i32) -> (i32, i32) {
    %c0_i32 = arith.constant 0 : i32
    %c0_i32_0 = arith.constant 0 : i32
    return %c0_i32, %arg0 : i32, i32
  }
  func.func @transform_1(%arg0: i32) -> (i32, i32) {
    %c0_i32 = arith.constant 0 : i32
    %c0_i32_0 = arith.constant 0 : i32
    %c0_i32_1 = arith.constant 0 : i32
    return %c0_i32, %c0_i32_0 : i32, i32
  }
  func.func @transform_2(%arg0: i32) -> (i32, i32) {
    %c0_i32 = arith.constant 0 : i32
    %c0_i32_0 = arith.constant 0 : i32
    %c0_i32_1 = arith.constant 0 : i32
    return %c0_i32, %c0_i32_0 : i32, i32
  }
  func.func @transform_3(%arg0: i32) -> (i32, i32) {
    %c0_i32 = arith.constant 0 : i32
    %c0_i32_0 = arith.constant 0 : i32
    %c0_i32_1 = arith.constant 0 : i32
    return %c0_i32, %c0_i32_0 : i32, i32
  }
  func.func @transform_4(%arg0: i32) -> (i32, i32) {
    %c0_i32 = arith.constant 0 : i32
    %c0_i32_0 = arith.constant 0 : i32
    %c0_i32_1 = arith.constant 0 : i32
    return %c0_i32, %c0_i32_0 : i32, i32
  }
  func.func @transform_5(%arg0: i32) -> (i32, i32) {
    %c0_i32 = arith.constant 0 : i32
    %c0_i32_0 = arith.constant 0 : i32
    return %c0_i32, %arg0 : i32, i32
  }
}

</mosaic_0001>

<llo_original>
// kernel: tpu_custom_call.1
$region0: #{tpu_custom_call.1}
  #allocation0 [shape = 'u32[]', space=smem, size = 0x4, offset = 0x4, fixed_abs, tag = 'smem constant byte address 0x4 - core index']
  #allocation1 [shape = 'u32[144,128]{1,0:T(1,128)}', space=vmem, size = 0x12000, scoped, tag = 'internal scratch']
  #allocation2 [shape = 'f32[1,1]{1,0:T(1,128)S(1)}', space=vmem, size = 0x200, scoped, tag = 'scoped memory for tpu_custom_call.1']
  %s0 = inlined_call_operand.vmem [shape: f32[1,128], index: 0, kind: input, shape index: {}]
  %s1 = inlined_call_operand.vmem [shape: f32[10,1], index: 1, kind: input, shape index: {}]
  %s2 = inlined_call_operand.vmem [shape: f32[10,1], index: 2, kind: input, shape index: {}]
  %s3 = inlined_call_operand.vmem [shape: f32[10,1], index: 3, kind: input, shape index: {}]
  %s4 = inlined_call_operand.<no memory space> [shape: f32[1,1], index: 4, kind: input, shape index: {}]
  %s5 = inlined_call_operand.hbm [shape: f32[1,128], index: 5, kind: output, shape index: {}]
  %s6 = sld [smem:[#allocation0]]
  $region30: #{tpu_custom_call.1} parent=0
    _
  %s8 = ssub.s32 1, %s6
  %s9 = scalar_select 0, %s8, %s6
  %v10 = vstv %s4
  %11 = vst [vmem:[#allocation2] sm:$0x1] %v10
  $region1: #{tpu_custom_call.1} parent=0
    #allocation3 [shape = 'u8[512]{0}', space=vmem, size = 0x400, scoped, tag = 'output window, operand 0, single buffered']
    #allocation4 [shape = 's32[1]{0}', space=sflag, size = 0x4, scoped, tag = 'scoped memory for tpu_custom_call.1']
    %12 = vsyncpa [#allocation4], 0
    // Predicated region
    $region2: #{tpu_custom_call.1} parent=1 // pred_check
      _
    $region3: #{tpu_custom_call.1} parent=1 // pred_check_branch
      %14 = sbr.rel (0) target = $region5
    $region4: #{tpu_custom_call.1} parent=1 // pred_region
      _
    $region5: #{tpu_custom_call.1} parent=1 // pred_fallthru
      _
    // Predicated region
    $region6: #{tpu_custom_call.1} parent=1 // pred_check
      _
    $region7: #{tpu_custom_call.1} parent=1 // pred_check_branch
      %16 = sbr.rel (0) target = $region9
    $region8: #{tpu_custom_call.1} parent=1 // pred_region
      _
    $region9: #{tpu_custom_call.1} parent=1 // pred_fallthru
      _
    // Predicated region
    $region10: #{tpu_custom_call.1} parent=1 // pred_check
      _
    $region11: #{tpu_custom_call.1} parent=1 // pred_check_branch
      %18 = sbr.rel (0) target = $region13
    $region12: #{tpu_custom_call.1} parent=1 // pred_region
      _
    $region13: #{tpu_custom_call.1} parent=1 // pred_fallthru
      _
    // Predicated region
    $region14: #{tpu_custom_call.1} parent=1 // pred_check
      _
    $region15: #{tpu_custom_call.1} parent=1 // pred_check_branch
      %20 = sbr.rel (0) target = $region17
    $region16: #{tpu_custom_call.1} parent=1 // pred_region
      _
    $region17: #{tpu_custom_call.1} parent=1 // pred_fallthru
      _
    // Predicated region
    $region18: #{tpu_custom_call.1} parent=1 // pred_check
      _
    $region19: #{tpu_custom_call.1} parent=1 // pred_check_branch
      %22 = sbr.rel (0) target = $region21
    $region20: #{tpu_custom_call.1} parent=1 // pred_region
      _
    $region21: #{tpu_custom_call.1} parent=1 // pred_fallthru
      _
    %v23 = vld [vmem:[%s0] sm:$0x1]
    %v24 = vld [vmem:[%s1] sm:$0xff]
    %v25 = vld [vmem:[%s1 + $0x8] sm:$0x3]
    %27 = vset.pattern.permute.xlu0 0
    %28 = vperm.xlu0 %27, %v24
    %v29 = vpop.permute.xlu0 %28
    %32 = vset.pattern.permute.xlu0 0
    %33 = vperm.xlu0 %32, %v25
    %v34 = vpop.permute.xlu0 %33
    %v37 = vlaneseq
    %v38 = vshrl.u32 %v37, 7
    %v39 = vsub.s32 0, %v38
    %v40 = vrot.slane %v23, %v39
    %v42 = vmul.f32 %v29, %v40
    %v43 = vmul.f32 %v34, %v40
    %v44 = vld [vmem:[%s2] sm:$0xff]
    %v45 = vld [vmem:[%s2 + $0x8] sm:$0x3]
    %47 = vset.pattern.permute.xlu0 0
    %48 = vperm.xlu0 %47, %v44
    %v49 = vpop.permute.xlu0 %48
    %52 = vset.pattern.permute.xlu0 0
    %53 = vperm.xlu0 %52, %v45
    %v54 = vpop.permute.xlu0 %53
    %v56 = vadd.f32 %v42, %v49
    %v57 = vadd.f32 %v43, %v54
    %v58 = vmax.f32 %v56, 0.0
    %v59 = vmax.f32 %v57, 0.0
    %v60 = vld [vmem:[%s3] sm:$0xff]
    %v61 = vld [vmem:[%s3 + $0x8] sm:$0x3]
    %63 = vset.pattern.permute.xlu0 0
    %64 = vperm.xlu0 %63, %v60
    %v65 = vpop.permute.xlu0 %64
    %68 = vset.pattern.permute.xlu0 0
    %69 = vperm.xlu0 %68, %v61
    %v70 = vpop.permute.xlu0 %69
    %v72 = vmul.f32 %v65, %v58
    %v73 = vmul.f32 %v70, %v59
    %vm74 = vcmask 1041408
    %v75 = vsel %vm74, %v73, 0.0
    %v76 = vadd.f32 %v72, %v75
    %v77 = vrot.slane %v76, 4
    %v78 = vadd.f32 %v76, %v77
    %v79 = vrot.slane %v78, 2
    %v80 = vadd.f32 %v78, %v79
    %v81 = vrot.slane %v80, 1
    %v82 = vadd.f32 %v80, %v81
    %v83 = vld [vmem:[#allocation2] sm:$0x1]
    %85 = vset.pattern.permute.xlu0 0
    %86 = vperm.xlu0 %85, %v83
    %v87 = vpop.permute.xlu0 %86
    %v89 = vlaneseq
    %v90 = vshrl.u32 %v89, 7
    %v91 = vsub.s32 0, %v90
    %v92 = vrot.slane %v87, %v91
    %v93 = vadd.f32 %v82, %v92
    %v94 = vxor.u32 %v93, 2147483648
    %v95 = vmul.f32 %v94, 1.442695
    %v96 = vpow.pop %v95
    %v97 = vadd.f32 %v96, 1.0
    %v98 = vrcp.pop %v97
    %v99 = vmul.f32 1.0, %v98
    %100 = vst [vmem:[#allocation3] sm:$0x1] %v99
    // Predicated region
    $region22: #{tpu_custom_call.1} parent=1 // pred_check
      _
    $region23: #{tpu_custom_call.1} parent=1 // pred_check_branch
      %102 = sbr.rel (0) target = $region25
    $region24: #{tpu_custom_call.1} parent=1 // pred_region
      %s104 = ssub.s32 16, 16
      %105 = vsyncadd [#allocation4], %s104
      %s107 = sshll.u32 [#allocation3], 4
      %s108 = int_to_ptr.vmem [resolvable:$true] %s107
      %110 = dma.vmem_to_hbm [thread:$0]  %s108, 16, %s5, [#allocation4]
    $region25: #{tpu_custom_call.1} parent=1 // pred_fallthru
      _
    // Predicated region
    $region26: #{tpu_custom_call.1} parent=1 // pred_check
      _
    $region27: #{tpu_custom_call.1} parent=1 // pred_check_branch
      %112 = sbr.rel (0) target = $region29
    $region28: #{tpu_custom_call.1} parent=1 // pred_region
      %113 = dma.done [#allocation4], 16
    $region29: #{tpu_custom_call.1} parent=1 // pred_fallthru
      _
    %114 = vsyncpa [#allocation4], 1

</llo_original>
